<compile_context>
chip_gen: v7x
topology: tpu7x:2x2x1
jax: 0.10.0
libtpu: 0.0.40
codegen_flags: <defaults>
</compile_context>

<pallas_src>
import functools

import jax
import jax.numpy as jnp
from jax import lax
from jax.experimental import pallas as pl
from jax.experimental.pallas import tpu as pltpu


# ---------------------------------------------------------------------------
# Kernels
# ---------------------------------------------------------------------------

def _snorm_flat_kernel(x_ref, s_ref, o_ref, *, n, eps):
    # Lane-dense path: x block is (tile, N*F); per-feature sums over N are
    # computed (and broadcast back to full width) by one MXU matmul each.
    x = x_ref[...].astype(jnp.float32)                      # (tile, NF)
    s = s_ref[...]                                          # (NF, NF) const 0/1
    sum_b = jnp.dot(x, s, preferred_element_type=jnp.float32)
    sumsq_b = jnp.dot(x * x, s, preferred_element_type=jnp.float32)
    mean = sum_b * jnp.float32(1.0 / n)
    # unbiased variance: (sum(x^2) - n*mean^2) / (n - 1); n*mean^2 == mean*sum
    var = (sumsq_b - mean * sum_b) * jnp.float32(1.0 / (n - 1))
    inv_std = lax.rsqrt(var + jnp.float32(eps))
    o_ref[...] = ((x - mean) * inv_std).astype(o_ref.dtype)


def _snorm_flat_affine_kernel(x_ref, s_ref, gamma_ref, beta_ref, o_ref, *, n, eps):
    x = x_ref[...].astype(jnp.float32)
    s = s_ref[...]
    sum_b = jnp.dot(x, s, preferred_element_type=jnp.float32)
    sumsq_b = jnp.dot(x * x, s, preferred_element_type=jnp.float32)
    mean = sum_b * jnp.float32(1.0 / n)
    var = (sumsq_b - mean * sum_b) * jnp.float32(1.0 / (n - 1))
    inv_std = lax.rsqrt(var + jnp.float32(eps))
    y = (x - mean) * inv_std
    # gamma/beta are pre-cast to f32 and pre-tiled to (1, N*F) in the wrapper.
    o_ref[...] = (y * gamma_ref[...] + beta_ref[...]).astype(o_ref.dtype)


def _snorm_3d_kernel(x_ref, o_ref, *, n, eps):
    # Fallback path: x block is (tile, N, F); normalize over axis -2.
    x = x_ref[...].astype(jnp.float32)
    s = jnp.sum(x, axis=-2, keepdims=True)
    sq = jnp.sum(x * x, axis=-2, keepdims=True)
    mean = s * jnp.float32(1.0 / n)
    var = (sq - mean * s) * jnp.float32(1.0 / (n - 1))
    inv_std = lax.rsqrt(var + jnp.float32(eps))
    o_ref[...] = ((x - mean) * inv_std).astype(o_ref.dtype)


def _snorm_3d_affine_kernel(x_ref, gamma_ref, beta_ref, o_ref, *, n, eps):
    x = x_ref[...].astype(jnp.float32)
    s = jnp.sum(x, axis=-2, keepdims=True)
    sq = jnp.sum(x * x, axis=-2, keepdims=True)
    mean = s * jnp.float32(1.0 / n)
    var = (sq - mean * s) * jnp.float32(1.0 / (n - 1))
    inv_std = lax.rsqrt(var + jnp.float32(eps))
    y = (x - mean) * inv_std
    # gamma/beta are (1, F) f32; broadcast over (tile, N, F).
    o_ref[...] = (y * gamma_ref[...] + beta_ref[...]).astype(o_ref.dtype)


# ---------------------------------------------------------------------------
# Wrapper
# ---------------------------------------------------------------------------

def _pick_tile(bt, row_bytes, target_block_bytes, sublane_align):
    cap = max(1, target_block_bytes // row_bytes)
    # Prefer >= 8 grid steps (>= 4 per TensorCore on dual-core chips) when each
    # step would still move >= 128 KiB; otherwise keep blocks at target size.
    min_steps = 8
    rows_for_min_steps = max(1, bt // min_steps)
    if rows_for_min_steps * row_bytes >= (128 << 10):
        cap = min(cap, rows_for_min_steps)
    if bt <= cap:
        return bt  # single full-extent block along the row axis (always legal)
    if sublane_align:
        return max(8, (cap // 8) * 8)
    return cap


def snorm(x, gamma=None, beta=None, *, bias=False, eps=1e-6,
          target_block_bytes=1 << 20):
    """SNorm forward: normalize over dim -2 (unbiased var), optional affine on dim -1."""
    B, T, N, F = x.shape
    if N < 2:
        raise ValueError("SNorm requires N >= 2 along dim -2 (unbiased variance).")
    if bias and (gamma is None or beta is None):
        raise ValueError("bias=True requires gamma and beta.")

    bt = B * T
    nf = N * F
    itemsize = jnp.dtype(x.dtype).itemsize
    row_bytes = nf * itemsize

    # Lane-dense flattened path whenever the last dim would waste lanes
    # (F % 128 != 0) but the (N, F) group flattens to a multiple of 128 lanes.
    # Cap the constant reduction matrix at 4 MiB of resident VMEM.
    use_flat = (F % 128 != 0) and (nf % 128 == 0) and (nf <= 1024)

    if use_flat:
        tile = _pick_tile(bt, row_bytes, target_block_bytes, sublane_align=True)
        grid = (pl.cdiv(bt, tile),)

        x2 = x.reshape(bt, nf)                               # free contiguous reshape
        col = jnp.arange(nf, dtype=jnp.int32)
        # smat[i, j] = 1 iff columns i, j belong to the same feature f = col % F.
        smat = (col[:, None] % F == col[None, :] % F).astype(jnp.float32)

        in_specs = [
            pl.BlockSpec((tile, nf), lambda i: (i, 0)),
            pl.BlockSpec((nf, nf), lambda i: (0, 0)),        # constant block, DMA'd once
        ]
        args = [x2, smat]
        if bias:
            g = jnp.tile(gamma.reshape(1, F).astype(jnp.float32), (1, N))  # (1, nf)
            b = jnp.tile(beta.reshape(1, F).astype(jnp.float32), (1, N))
            in_specs += [
                pl.BlockSpec((1, nf), lambda i: (0, 0)),
                pl.BlockSpec((1, nf), lambda i: (0, 0)),
            ]
            args += [g, b]
            kernel = functools.partial(_snorm_flat_affine_kernel, n=N, eps=eps)
        else:
            kernel = functools.partial(_snorm_flat_kernel, n=N, eps=eps)

        out_spec = pl.BlockSpec((tile, nf), lambda i: (i, 0))
        out_shape = jax.ShapeDtypeStruct((bt, nf), x.dtype)

        smat_bytes = nf * nf * 4
        flops = 2 * (2 * bt * nf * nf) + 8 * bt * nf
        bytes_accessed = 2 * bt * nf * itemsize + smat_bytes
    else:
        # TODO(synk): when neither F nor N*F is a multiple of 128, lanes stay
        # partially masked; a fully lane-dense layout needs upstream padding of F.
        tile = _pick_tile(bt, row_bytes, target_block_bytes, sublane_align=False)
        grid = (pl.cdiv(bt, tile),)

        x2 = x.reshape(bt, N, F)
        in_specs = [pl.BlockSpec((tile, N, F), lambda i: (i, 0, 0))]
        args = [x2]
        if bias:
            g = gamma.reshape(1, F).astype(jnp.float32)
            b = beta.reshape(1, F).astype(jnp.float32)
            in_specs += [
                pl.BlockSpec((1, F), lambda i: (0, 0)),
                pl.BlockSpec((1, F), lambda i: (0, 0)),
            ]
            args += [g, b]
            kernel = functools.partial(_snorm_3d_affine_kernel, n=N, eps=eps)
        else:
            kernel = functools.partial(_snorm_3d_kernel, n=N, eps=eps)

        out_spec = pl.BlockSpec((tile, N, F), lambda i: (i, 0, 0))
        out_shape = jax.ShapeDtypeStruct((bt, N, F), x.dtype)

        smat_bytes = 0
        flops = 8 * bt * nf
        bytes_accessed = 2 * bt * nf * itemsize

    # VMEM budget: double-buffered in + out blocks, ~3 block-sized f32
    # temporaries, the resident constant matrix / params, plus headroom.
    block_in_bytes = tile * nf * itemsize
    block_f32_bytes = tile * nf * 4
    working_set = 4 * block_in_bytes + 3 * block_f32_bytes + smat_bytes + (1 << 20)
    vmem_limit = int(min(48 << 20, max(32 << 20, 2 * working_set)))

    cost = pl.CostEstimate(
        flops=int(flops),
        transcendentals=int(bt * nf),
        bytes_accessed=int(bytes_accessed),
    )

    out = pl.pallas_call(
        kernel,
        out_shape=out_shape,
        grid_spec=pltpu.PrefetchScalarGridSpec(
            num_scalar_prefetch=0,
            grid=grid,
            in_specs=in_specs,
            out_specs=out_spec,
        ),
        compiler_params=pltpu.CompilerParams(
            dimension_semantics=("parallel",),
            vmem_limit_bytes=vmem_limit,
        ),
        cost_estimate=cost,
    )(*args)
    return out.reshape(B, T, N, F)


def snorm_reference(x, gamma=None, beta=None, *, bias=False, eps=1e-6):
    xf = x.astype(jnp.float32)
    mean = jnp.mean(xf, axis=-2, keepdims=True)
    var = jnp.var(xf, axis=-2, keepdims=True, ddof=1)
    x_norm = (xf - mean) / jnp.sqrt(var + eps)
    if bias:
        x_norm = x_norm * gamma + beta
    return x_norm.astype(x.dtype)


if __name__ == "__main__":
    key = jax.random.PRNGKey(0)
    B, T, N, F = 2, 4, 16, 32  # batch, tokens, normalized axis, feat_size

    x = jax.random.normal(key, (B, T, N, F), dtype=jnp.float32)

    # bias=False (module default): lane-dense flattened path (N*F = 512).
    out0 = jax.block_until_ready(snorm(x, bias=False))
    ref0 = snorm_reference(x, bias=False)
    assert out0.shape == (B, T, N, F)
    assert jnp.allclose(out0, ref0, atol=2e-4, rtol=2e-4)

    # bias=True path: deterministic parameter init matching SNorm.__init__.
    gamma = jnp.ones((1, 1, 1, F), dtype=jnp.float32)
    beta = jnp.zeros((1, 1, 1, F), dtype=jnp.float32)
    out1 = jax.block_until_ready(snorm(x, gamma, beta, bias=True))
    ref1 = snorm_reference(x, gamma, beta, bias=True)
    assert out1.shape == (B, T, N, F)
    assert jnp.allclose(out1, ref1, atol=2e-4, rtol=2e-4)

    # Fallback (non-lane-dense) path: N*F not a multiple of 128.
    x2 = jax.random.normal(jax.random.PRNGKey(1), (2, 4, 8, 24), dtype=jnp.float32)
    out2 = jax.block_until_ready(snorm(x2, bias=False))
    ref2 = snorm_reference(x2, bias=False)
    assert out2.shape == x2.shape
    assert jnp.allclose(out2, ref2, atol=2e-4, rtol=2e-4)

    print("KERNEL_OK")
</pallas_src>

<mosaic_0001>
module attributes {stable_mosaic.version = 11 : i64} {
  func.func @_snorm_flat_kernel(%arg0: i32, %arg1: memref<8x512xf32, #tpu.memory_space<vmem>>, %arg2: memref<512x512xf32, #tpu.memory_space<vmem>>, %arg3: memref<8x512xf32, #tpu.memory_space<vmem>>) attributes {dimension_semantics = [#tpu.dimension_semantics<parallel>], iteration_bounds = array<i64: 1>, scalar_prefetch = 0 : i64, scratch_operands = 0 : i64, tpu.core_type = #tpu.core_type<tc>, window_params = [{transform_indices = @transform_0, window_bounds = array<i64: 8, 512>}, {pipeline_mode = #tpu.pipeline_mode<synchronous>, transform_indices = @transform_1, window_bounds = array<i64: 512, 512>}, {transform_indices = @transform_2, window_bounds = array<i64: 8, 512>}]} {
    %c0 = arith.constant 0 : index
    %c0_0 = arith.constant 0 : index
    %0 = vector.load %arg1[%c0, %c0_0] : memref<8x512xf32, #tpu.memory_space<vmem>>, vector<8x512xf32>
    %c0_1 = arith.constant 0 : index
    %c0_2 = arith.constant 0 : index
    %1 = vector.load %arg2[%c0_1, %c0_2] : memref<512x512xf32, #tpu.memory_space<vmem>>, vector<512x512xf32>
    %cst = arith.constant dense<0.000000e+00> : vector<8x512xf32>
    %2 = tpu.matmul %0, %1, %cst {dimension_numbers = #tpu.dot_dimension_numbers<[1], [0], [0], [1], [0, 0, 1, 1], [], []>} : vector<8x512xf32>, vector<512x512xf32>, vector<8x512xf32> -> vector<8x512xf32>
    %3 = arith.mulf %0, %0 : vector<8x512xf32>
    %cst_3 = arith.constant dense<0.000000e+00> : vector<8x512xf32>
    %4 = tpu.matmul %3, %1, %cst_3 {dimension_numbers = #tpu.dot_dimension_numbers<[1], [0], [0], [1], [0, 0, 1, 1], [], []>} : vector<8x512xf32>, vector<512x512xf32>, vector<8x512xf32> -> vector<8x512xf32>
    %cst_4 = arith.constant 6.250000e-02 : f32
    %5 = vector.broadcast %cst_4 : f32 to vector<8x512xf32>
    %6 = arith.mulf %2, %5 : vector<8x512xf32>
    %7 = arith.mulf %6, %2 : vector<8x512xf32>
    %8 = arith.subf %4, %7 : vector<8x512xf32>
    %cst_5 = arith.constant 0.0666666701 : f32
    %9 = vector.broadcast %cst_5 : f32 to vector<8x512xf32>
    %10 = arith.mulf %8, %9 : vector<8x512xf32>
    %cst_6 = arith.constant 9.99999997E-7 : f32
    %11 = vector.broadcast %cst_6 : f32 to vector<8x512xf32>
    %12 = arith.addf %10, %11 : vector<8x512xf32>
    %13 = math.rsqrt %12 : vector<8x512xf32>
    %14 = arith.subf %0, %6 : vector<8x512xf32>
    %15 = arith.mulf %14, %13 : vector<8x512xf32>
    %c0_7 = arith.constant 0 : index
    %c0_8 = arith.constant 0 : index
    %16 = vector.load %arg3[%c0_7, %c0_8] : memref<8x512xf32, #tpu.memory_space<vmem>>, vector<8x512xf32>
    tpu.vector_store %arg3[%c0_7, %c0_8], %15 {strides = array<i32>} : memref<8x512xf32, #tpu.memory_space<vmem>>, vector<8x512xf32>,
    return
  }
  func.func @transform_0(%arg0: i32) -> (i32, i32) {
    %c0_i32 = arith.constant 0 : i32
    %c0_i32_0 = arith.constant 0 : i32
    return %arg0, %c0_i32 : i32, i32
  }
  func.func @transform_1(%arg0: i32) -> (i32, i32) {
    %c0_i32 = arith.constant 0 : i32
    %c0_i32_0 = arith.constant 0 : i32
    %c0_i32_1 = arith.constant 0 : i32
    return %c0_i32, %c0_i32_0 : i32, i32
  }
  func.func @transform_2(%arg0: i32) -> (i32, i32) {
    %c0_i32 = arith.constant 0 : i32
    %c0_i32_0 = arith.constant 0 : i32
    return %arg0, %c0_i32 : i32, i32
  }
}

</mosaic_0001>

<llo_original>
// kernel: tpu_custom_call.1
$region0: #{tpu_custom_call.1}
  #allocation0 [shape = 'u32[]', space=smem, size = 0x4, offset = 0x4, fixed_abs, tag = 'smem constant byte address 0x4 - core index']
  #allocation1 [shape = 'u32[144,128]{1,0:T(1,128)}', space=vmem, size = 0x12000, scoped, tag = 'internal scratch']
  %s0 = inlined_call_operand.hbm [shape: f32[8,512], index: 0, kind: input, shape index: {}]
  %s1 = inlined_call_operand.hbm [shape: f32[512,512], index: 1, kind: input, shape index: {}]
  %s2 = inlined_call_operand.hbm [shape: f32[8,512], index: 2, kind: output, shape index: {}]
  %s3 = sld [smem:[#allocation0]]
  $region26: #{tpu_custom_call.1} parent=0
    _
  %s5 = ssub.s32 1, %s3
  %s6 = scalar_select 0, %s5, %s3
  $region1: #{tpu_custom_call.1} parent=0
    #allocation2 [shape = 'u8[16384]{0}', space=vmem, size = 0x4000, scoped, tag = 'input window, operand 0, single buffered']
    #allocation3 [shape = 's32[1]{0}', space=sflag, size = 0x4, scoped, tag = 'scoped memory for tpu_custom_call.1']
    #allocation4 [shape = 's32[1]{0}', space=sflag, size = 0x4, scoped, tag = 'scoped memory for tpu_custom_call.1']
    #allocation5 [shape = 'u8[1048576]{0}', space=vmem, size = 0x100000, scoped, tag = 'input window, operand 1, single buffered']
    #allocation6 [shape = 's32[1]{0}', space=sflag, size = 0x4, scoped, tag = 'scoped memory for tpu_custom_call.1']
    #allocation7 [shape = 'u8[16384]{0}', space=vmem, size = 0x4000, scoped, tag = 'output window, operand 0, single buffered']
    %7 = vsyncpa [#allocation3], 0
    %8 = vsyncpa [#allocation6], 0
    %9 = vsyncpa [#allocation4], 0
    // Predicated region
    $region2: #{tpu_custom_call.1} parent=1 // pred_check
      _
    $region3: #{tpu_custom_call.1} parent=1 // pred_check_branch
      %11 = sbr.rel (0) target = $region5
    $region4: #{tpu_custom_call.1} parent=1 // pred_region
      %s13 = ssub.s32 512, 512
      %14 = vsyncadd [#allocation3], %s13
      %s16 = sshll.u32 [#allocation2], 4
      %s17 = int_to_ptr.vmem [resolvable:$true] %s16
      %19 = dma.hbm_to_vmem [thread:$0]  %s0, 512, %s17, [#allocation3]
    $region5: #{tpu_custom_call.1} parent=1 // pred_fallthru
      _
    // Predicated region
    $region6: #{tpu_custom_call.1} parent=1 // pred_check
      _
    $region7: #{tpu_custom_call.1} parent=1 // pred_check_branch
      %21 = sbr.rel (0) target = $region9
    $region8: #{tpu_custom_call.1} parent=1 // pred_region
      %s23 = ssub.s32 32768, 32768
      %24 = vsyncadd [#allocation6], %s23
      %s25 = sshll.u32 [#allocation5], 4
      %s26 = int_to_ptr.vmem [resolvable:$true] %s25
      %31 = dma.hbm_to_vmem [thread:$0]  %s1, 32768, %s26, [#allocation6], 512, 512, 32
    $region9: #{tpu_custom_call.1} parent=1 // pred_fallthru
      _
    // Predicated region
    $region10: #{tpu_custom_call.1} parent=1 // pred_check
      _
    $region11: #{tpu_custom_call.1} parent=1 // pred_check_branch
      %33 = sbr.rel (0) target = $region13
    $region12: #{tpu_custom_call.1} parent=1 // pred_region
      %34 = dma.done [#allocation3], 512
    $region13: #{tpu_custom_call.1} parent=1 // pred_fallthru
      _
    // Predicated region
    $region14: #{tpu_custom_call.1} parent=1 // pred_check
      _
    $region15: #{tpu_custom_call.1} parent=1 // pred_check_branch
      %36 = sbr.rel (0) target = $region17
    $region16: #{tpu_custom_call.1} parent=1 // pred_region
      %37 = dma.done [#allocation6], 32768
    $region17: #{tpu_custom_call.1} parent=1 // pred_fallthru
      _
    %v38 = vld [vmem:[#allocation2] sm:$0xff]
    %v39 = vld [vmem:[#allocation2 + $0x8] sm:$0xff]
    %v40 = vld [vmem:[#allocation2 + $0x10] sm:$0xff]
    %v41 = vld [vmem:[#allocation2 + $0x18] sm:$0xff]
    %v42 = vld [vmem:[#allocation5] sm:$0xff]
    %v43 = vld [vmem:[#allocation5 + $0x8] sm:$0xff]
    %v44 = vld [vmem:[#allocation5 + $0x10] sm:$0xff]
    %v45 = vld [vmem:[#allocation5 + $0x18] sm:$0xff]
    %v46 = vld [vmem:[#allocation5 + $0x20] sm:$0xff]
    %v47 = vld [vmem:[#allocation5 + $0x28] sm:$0xff]
    %v48 = vld [vmem:[#allocation5 + $0x30] sm:$0xff]
    %v49 = vld [vmem:[#allocation5 + $0x38] sm:$0xff]
    %v50 = vld [vmem:[#allocation5 + $0x40] sm:$0xff]
    %v51 = vld [vmem:[#allocation5 + $0x48] sm:$0xff]
    %v52 = vld [vmem:[#allocation5 + $0x50] sm:$0xff]
    %v53 = vld [vmem:[#allocation5 + $0x58] sm:$0xff]
    %v54 = vld [vmem:[#allocation5 + $0x60] sm:$0xff]
    %v55 = vld [vmem:[#allocation5 + $0x68] sm:$0xff]
    %v56 = vld [vmem:[#allocation5 + $0x70] sm:$0xff]
    %v57 = vld [vmem:[#allocation5 + $0x78] sm:$0xff]
    %v58 = vld [vmem:[#allocation5 + $0x80] sm:$0xff]
    %v59 = vld [vmem:[#allocation5 + $0x88] sm:$0xff]
    %v60 = vld [vmem:[#allocation5 + $0x90] sm:$0xff]
    %v61 = vld [vmem:[#allocation5 + $0x98] sm:$0xff]
    %v62 = vld [vmem:[#allocation5 + $0xa0] sm:$0xff]
    %v63 = vld [vmem:[#allocation5 + $0xa8] sm:$0xff]
    %v64 = vld [vmem:[#allocation5 + $0xb0] sm:$0xff]
    %v65 = vld [vmem:[#allocation5 + $0xb8] sm:$0xff]
    %v66 = vld [vmem:[#allocation5 + $0xc0] sm:$0xff]
    %v67 = vld [vmem:[#allocation5 + $0xc8] sm:$0xff]
    %v68 = vld [vmem:[#allocation5 + $0xd0] sm:$0xff]
    %v69 = vld [vmem:[#allocation5 + $0xd8] sm:$0xff]
    %v70 = vld [vmem:[#allocation5 + $0xe0] sm:$0xff]
    %v71 = vld [vmem:[#allocation5 + $0xe8] sm:$0xff]
    %v72 = vld [vmem:[#allocation5 + $0xf0] sm:$0xff]
    %v73 = vld [vmem:[#allocation5 + $0xf8] sm:$0xff]
    %v74 = vld [vmem:[#allocation5 + $0x100] sm:$0xff]
    %v75 = vld [vmem:[#allocation5 + $0x108] sm:$0xff]
    %v76 = vld [vmem:[#allocation5 + $0x110] sm:$0xff]
    %v77 = vld [vmem:[#allocation5 + $0x118] sm:$0xff]
    %v78 = vld [vmem:[#allocation5 + $0x120] sm:$0xff]
    %v79 = vld [vmem:[#allocation5 + $0x128] sm:$0xff]
    %v80 = vld [vmem:[#allocation5 + $0x130] sm:$0xff]
    %v81 = vld [vmem:[#allocation5 + $0x138] sm:$0xff]
    %v82 = vld [vmem:[#allocation5 + $0x140] sm:$0xff]
    %v83 = vld [vmem:[#allocation5 + $0x148] sm:$0xff]
    %v84 = vld [vmem:[#allocation5 + $0x150] sm:$0xff]
    %v85 = vld [vmem:[#allocation5 + $0x158] sm:$0xff]
    %v86 = vld [vmem:[#allocation5 + $0x160] sm:$0xff]
    %v87 = vld [vmem:[#allocation5 + $0x168] sm:$0xff]
    %v88 = vld [vmem:[#allocation5 + $0x170] sm:$0xff]
    %v89 = vld [vmem:[#allocation5 + $0x178] sm:$0xff]
    %v90 = vld [vmem:[#allocation5 + $0x180] sm:$0xff]
    %v91 = vld [vmem:[#allocation5 + $0x188] sm:$0xff]
    %v92 = vld [vmem:[#allocation5 + $0x190] sm:$0xff]
    %v93 = vld [vmem:[#allocation5 + $0x198] sm:$0xff]
    %v94 = vld [vmem:[#allocation5 + $0x1a0] sm:$0xff]
    %v95 = vld [vmem:[#allocation5 + $0x1a8] sm:$0xff]
    %v96 = vld [vmem:[#allocation5 + $0x1b0] sm:$0xff]
    %v97 = vld [vmem:[#allocation5 + $0x1b8] sm:$0xff]
    %v98 = vld [vmem:[#allocation5 + $0x1c0] sm:$0xff]
    %v99 = vld [vmem:[#allocation5 + $0x1c8] sm:$0xff]
    %v100 = vld [vmem:[#allocation5 + $0x1d0] sm:$0xff]
    %v101 = vld [vmem:[#allocation5 + $0x1d8] sm:$0xff]
    %v102 = vld [vmem:[#allocation5 + $0x1e0] sm:$0xff]
    %v103 = vld [vmem:[#allocation5 + $0x1e8] sm:$0xff]
    %v104 = vld [vmem:[#allocation5 + $0x1f0] sm:$0xff]
    %v105 = vld [vmem:[#allocation5 + $0x1f8] sm:$0xff]
    %v106 = vld [vmem:[#allocation5 + $0x200] sm:$0xff]
    %v107 = vld [vmem:[#allocation5 + $0x208] sm:$0xff]
    %v108 = vld [vmem:[#allocation5 + $0x210] sm:$0xff]
    %v109 = vld [vmem:[#allocation5 + $0x218] sm:$0xff]
    %v110 = vld [vmem:[#allocation5 + $0x220] sm:$0xff]
    %v111 = vld [vmem:[#allocation5 + $0x228] sm:$0xff]
    %v112 = vld [vmem:[#allocation5 + $0x230] sm:$0xff]
    %v113 = vld [vmem:[#allocation5 + $0x238] sm:$0xff]
    %v114 = vld [vmem:[#allocation5 + $0x240] sm:$0xff]
    %v115 = vld [vmem:[#allocation5 + $0x248] sm:$0xff]
    %v116 = vld [vmem:[#allocation5 + $0x250] sm:$0xff]
    %v117 = vld [vmem:[#allocation5 + $0x258] sm:$0xff]
    %v118 = vld [vmem:[#allocation5 + $0x260] sm:$0xff]
    %v119 = vld [vmem:[#allocation5 + $0x268] sm:$0xff]
    %v120 = vld [vmem:[#allocation5 + $0x270] sm:$0xff]
    %v121 = vld [vmem:[#allocation5 + $0x278] sm:$0xff]
    %v122 = vld [vmem:[#allocation5 + $0x280] sm:$0xff]
    %v123 = vld [vmem:[#allocation5 + $0x288] sm:$0xff]
    %v124 = vld [vmem:[#allocation5 + $0x290] sm:$0xff]
    %v125 = vld [vmem:[#allocation5 + $0x298] sm:$0xff]
    %v126 = vld [vmem:[#allocation5 + $0x2a0] sm:$0xff]
    %v127 = vld [vmem:[#allocation5 + $0x2a8] sm:$0xff]
    %v128 = vld [vmem:[#allocation5 + $0x2b0] sm:$0xff]
    %v129 = vld [vmem:[#allocation5 + $0x2b8] sm:$0xff]
    %v130 = vld [vmem:[#allocation5 + $0x2c0] sm:$0xff]
    %v131 = vld [vmem:[#allocation5 + $0x2c8] sm:$0xff]
    %v132 = vld [vmem:[#allocation5 + $0x2d0] sm:$0xff]
    %v133 = vld [vmem:[#allocation5 + $0x2d8] sm:$0xff]
    %v134 = vld [vmem:[#allocation5 + $0x2e0] sm:$0xff]
    %v135 = vld [vmem:[#allocation5 + $0x2e8] sm:$0xff]
    %v136 = vld [vmem:[#allocation5 + $0x2f0] sm:$0xff]
    %v137 = vld [vmem:[#allocation5 + $0x2f8] sm:$0xff]
    %v138 = vld [vmem:[#allocation5 + $0x300] sm:$0xff]
    %v139 = vld [vmem:[#allocation5 + $0x308] sm:$0xff]
    %v140 = vld [vmem:[#allocation5 + $0x310] sm:$0xff]
    %v141 = vld [vmem:[#allocation5 + $0x318] sm:$0xff]
    %v142 = vld [vmem:[#allocation5 + $0x320] sm:$0xff]
    %v143 = vld [vmem:[#allocation5 + $0x328] sm:$0xff]
    %v144 = vld [vmem:[#allocation5 + $0x330] sm:$0xff]
    %v145 = vld [vmem:[#allocation5 + $0x338] sm:$0xff]
    %v146 = vld [vmem:[#allocation5 + $0x340] sm:$0xff]
    %v147 = vld [vmem:[#allocation5 + $0x348] sm:$0xff]
    %v148 = vld [vmem:[#allocation5 + $0x350] sm:$0xff]
    %v149 = vld [vmem:[#allocation5 + $0x358] sm:$0xff]
    %v150 = vld [vmem:[#allocation5 + $0x360] sm:$0xff]
    %v151 = vld [vmem:[#allocation5 + $0x368] sm:$0xff]
    %v152 = vld [vmem:[#allocation5 + $0x370] sm:$0xff]
    %v153 = vld [vmem:[#allocation5 + $0x378] sm:$0xff]
    %v154 = vld [vmem:[#allocation5 + $0x380] sm:$0xff]
    %v155 = vld [vmem:[#allocation5 + $0x388] sm:$0xff]
    %v156 = vld [vmem:[#allocation5 + $0x390] sm:$0xff]
    %v157 = vld [vmem:[#allocation5 + $0x398] sm:$0xff]
    %v158 = vld [vmem:[#allocation5 + $0x3a0] sm:$0xff]
    %v159 = vld [vmem:[#allocation5 + $0x3a8] sm:$0xff]
    %v160 = vld [vmem:[#allocation5 + $0x3b0] sm:$0xff]
    %v161 = vld [vmem:[#allocation5 + $0x3b8] sm:$0xff]
    %v162 = vld [vmem:[#allocation5 + $0x3c0] sm:$0xff]
    %v163 = vld [vmem:[#allocation5 + $0x3c8] sm:$0xff]
    %v164 = vld [vmem:[#allocation5 + $0x3d0] sm:$0xff]
    %v165 = vld [vmem:[#allocation5 + $0x3d8] sm:$0xff]
    %v166 = vld [vmem:[#allocation5 + $0x3e0] sm:$0xff]
    %v167 = vld [vmem:[#allocation5 + $0x3e8] sm:$0xff]
    %v168 = vld [vmem:[#allocation5 + $0x3f0] sm:$0xff]
    %v169 = vld [vmem:[#allocation5 + $0x3f8] sm:$0xff]
    %v170 = vld [vmem:[#allocation5 + $0x400] sm:$0xff]
    %v171 = vld [vmem:[#allocation5 + $0x408] sm:$0xff]
    %v172 = vld [vmem:[#allocation5 + $0x410] sm:$0xff]
    %v173 = vld [vmem:[#allocation5 + $0x418] sm:$0xff]
    %v174 = vld [vmem:[#allocation5 + $0x420] sm:$0xff]
    %v175 = vld [vmem:[#allocation5 + $0x428] sm:$0xff]
    %v176 = vld [vmem:[#allocation5 + $0x430] sm:$0xff]
    %v177 = vld [vmem:[#allocation5 + $0x438] sm:$0xff]
    %v178 = vld [vmem:[#allocation5 + $0x440] sm:$0xff]
    %v179 = vld [vmem:[#allocation5 + $0x448] sm:$0xff]
    %v180 = vld [vmem:[#allocation5 + $0x450] sm:$0xff]
    %v181 = vld [vmem:[#allocation5 + $0x458] sm:$0xff]
    %v182 = vld [vmem:[#allocation5 + $0x460] sm:$0xff]
    %v183 = vld [vmem:[#allocation5 + $0x468] sm:$0xff]
    %v184 = vld [vmem:[#allocation5 + $0x470] sm:$0xff]
    %v185 = vld [vmem:[#allocation5 + $0x478] sm:$0xff]
    %v186 = vld [vmem:[#allocation5 + $0x480] sm:$0xff]
    %v187 = vld [vmem:[#allocation5 + $0x488] sm:$0xff]
    %v188 = vld [vmem:[#allocation5 + $0x490] sm:$0xff]
    %v189 = vld [vmem:[#allocation5 + $0x498] sm:$0xff]
    %v190 = vld [vmem:[#allocation5 + $0x4a0] sm:$0xff]
    %v191 = vld [vmem:[#allocation5 + $0x4a8] sm:$0xff]
    %v192 = vld [vmem:[#allocation5 + $0x4b0] sm:$0xff]
    %v193 = vld [vmem:[#allocation5 + $0x4b8] sm:$0xff]
    %v194 = vld [vmem:[#allocation5 + $0x4c0] sm:$0xff]
    %v195 = vld [vmem:[#allocation5 + $0x4c8] sm:$0xff]
    %v196 = vld [vmem:[#allocation5 + $0x4d0] sm:$0xff]
    %v197 = vld [vmem:[#allocation5 + $0x4d8] sm:$0xff]
    %v198 = vld [vmem:[#allocation5 + $0x4e0] sm:$0xff]
    %v199 = vld [vmem:[#allocation5 + $0x4e8] sm:$0xff]
    %v200 = vld [vmem:[#allocation5 + $0x4f0] sm:$0xff]
    %v201 = vld [vmem:[#allocation5 + $0x4f8] sm:$0xff]
    %v202 = vld [vmem:[#allocation5 + $0x500] sm:$0xff]
    %v203 = vld [vmem:[#allocation5 + $0x508] sm:$0xff]
    %v204 = vld [vmem:[#allocation5 + $0x510] sm:$0xff]
    %v205 = vld [vmem:[#allocation5 + $0x518] sm:$0xff]
    %v206 = vld [vmem:[#allocation5 + $0x520] sm:$0xff]
    %v207 = vld [vmem:[#allocation5 + $0x528] sm:$0xff]
    %v208 = vld [vmem:[#allocation5 + $0x530] sm:$0xff]
    %v209 = vld [vmem:[#allocation5 + $0x538] sm:$0xff]
    %v210 = vld [vmem:[#allocation5 + $0x540] sm:$0xff]
    %v211 = vld [vmem:[#allocation5 + $0x548] sm:$0xff]
    %v212 = vld [vmem:[#allocation5 + $0x550] sm:$0xff]
    %v213 = vld [vmem:[#allocation5 + $0x558] sm:$0xff]
    %v214 = vld [vmem:[#allocation5 + $0x560] sm:$0xff]
    %v215 = vld [vmem:[#allocation5 + $0x568] sm:$0xff]
    %v216 = vld [vmem:[#allocation5 + $0x570] sm:$0xff]
    %v217 = vld [vmem:[#allocation5 + $0x578] sm:$0xff]
    %v218 = vld [vmem:[#allocation5 + $0x580] sm:$0xff]
    %v219 = vld [vmem:[#allocation5 + $0x588] sm:$0xff]
    %v220 = vld [vmem:[#allocation5 + $0x590] sm:$0xff]
    %v221 = vld [vmem:[#allocation5 + $0x598] sm:$0xff]
    %v222 = vld [vmem:[#allocation5 + $0x5a0] sm:$0xff]
    %v223 = vld [vmem:[#allocation5 + $0x5a8] sm:$0xff]
    %v224 = vld [vmem:[#allocation5 + $0x5b0] sm:$0xff]
    %v225 = vld [vmem:[#allocation5 + $0x5b8] sm:$0xff]
    %v226 = vld [vmem:[#allocation5 + $0x5c0] sm:$0xff]
    %v227 = vld [vmem:[#allocation5 + $0x5c8] sm:$0xff]
    %v228 = vld [vmem:[#allocation5 + $0x5d0] sm:$0xff]
    %v229 = vld [vmem:[#allocation5 + $0x5d8] sm:$0xff]
    %v230 = vld [vmem:[#allocation5 + $0x5e0] sm:$0xff]
    %v231 = vld [vmem:[#allocation5 + $0x5e8] sm:$0xff]
    %v232 = vld [vmem:[#allocation5 + $0x5f0] sm:$0xff]
    %v233 = vld [vmem:[#allocation5 + $0x5f8] sm:$0xff]
    %v234 = vld [vmem:[#allocation5 + $0x600] sm:$0xff]
    %v235 = vld [vmem:[#allocation5 + $0x608] sm:$0xff]
    %v236 = vld [vmem:[#allocation5 + $0x610] sm:$0xff]
    %v237 = vld [vmem:[#allocation5 + $0x618] sm:$0xff]
    %v238 = vld [vmem:[#allocation5 + $0x620] sm:$0xff]
    %v239 = vld [vmem:[#allocation5 + $0x628] sm:$0xff]
    %v240 = vld [vmem:[#allocation5 + $0x630] sm:$0xff]
    %v241 = vld [vmem:[#allocation5 + $0x638] sm:$0xff]
    %v242 = vld [vmem:[#allocation5 + $0x640] sm:$0xff]
    %v243 = vld [vmem:[#allocation5 + $0x648] sm:$0xff]
    %v244 = vld [vmem:[#allocation5 + $0x650] sm:$0xff]
    %v245 = vld [vmem:[#allocation5 + $0x658] sm:$0xff]
    %v246 = vld [vmem:[#allocation5 + $0x660] sm:$0xff]
    %v247 = vld [vmem:[#allocation5 + $0x668] sm:$0xff]
    %v248 = vld [vmem:[#allocation5 + $0x670] sm:$0xff]
    %v249 = vld [vmem:[#allocation5 + $0x678] sm:$0xff]
    %v250 = vld [vmem:[#allocation5 + $0x680] sm:$0xff]
    %v251 = vld [vmem:[#allocation5 + $0x688] sm:$0xff]
    %v252 = vld [vmem:[#allocation5 + $0x690] sm:$0xff]
    %v253 = vld [vmem:[#allocation5 + $0x698] sm:$0xff]
    %v254 = vld [vmem:[#allocation5 + $0x6a0] sm:$0xff]
    %v255 = vld [vmem:[#allocation5 + $0x6a8] sm:$0xff]
    %v256 = vld [vmem:[#allocation5 + $0x6b0] sm:$0xff]
    %v257 = vld [vmem:[#allocation5 + $0x6b8] sm:$0xff]
    %v258 = vld [vmem:[#allocation5 + $0x6c0] sm:$0xff]
    %v259 = vld [vmem:[#allocation5 + $0x6c8] sm:$0xff]
    %v260 = vld [vmem:[#allocation5 + $0x6d0] sm:$0xff]
    %v261 = vld [vmem:[#allocation5 + $0x6d8] sm:$0xff]
    %v262 = vld [vmem:[#allocation5 + $0x6e0] sm:$0xff]
    %v263 = vld [vmem:[#allocation5 + $0x6e8] sm:$0xff]
    %v264 = vld [vmem:[#allocation5 + $0x6f0] sm:$0xff]
    %v265 = vld [vmem:[#allocation5 + $0x6f8] sm:$0xff]
    %v266 = vld [vmem:[#allocation5 + $0x700] sm:$0xff]
    %v267 = vld [vmem:[#allocation5 + $0x708] sm:$0xff]
    %v268 = vld [vmem:[#allocation5 + $0x710] sm:$0xff]
    %v269 = vld [vmem:[#allocation5 + $0x718] sm:$0xff]
    %v270 = vld [vmem:[#allocation5 + $0x720] sm:$0xff]
    %v271 = vld [vmem:[#allocation5 + $0x728] sm:$0xff]
    %v272 = vld [vmem:[#allocation5 + $0x730] sm:$0xff]
    %v273 = vld [vmem:[#allocation5 + $0x738] sm:$0xff]
    %v274 = vld [vmem:[#allocation5 + $0x740] sm:$0xff]
    %v275 = vld [vmem:[#allocation5 + $0x748] sm:$0xff]
    %v276 = vld [vmem:[#allocation5 + $0x750] sm:$0xff]
    %v277 = vld [vmem:[#allocation5 + $0x758] sm:$0xff]
    %v278 = vld [vmem:[#allocation5 + $0x760] sm:$0xff]
    %v279 = vld [vmem:[#allocation5 + $0x768] sm:$0xff]
    %v280 = vld [vmem:[#allocation5 + $0x770] sm:$0xff]
    %v281 = vld [vmem:[#allocation5 + $0x778] sm:$0xff]
    %v282 = vld [vmem:[#allocation5 + $0x780] sm:$0xff]
    %v283 = vld [vmem:[#allocation5 + $0x788] sm:$0xff]
    %v284 = vld [vmem:[#allocation5 + $0x790] sm:$0xff]
    %v285 = vld [vmem:[#allocation5 + $0x798] sm:$0xff]
    %v286 = vld [vmem:[#allocation5 + $0x7a0] sm:$0xff]
    %v287 = vld [vmem:[#allocation5 + $0x7a8] sm:$0xff]
    %v288 = vld [vmem:[#allocation5 + $0x7b0] sm:$0xff]
    %v289 = vld [vmem:[#allocation5 + $0x7b8] sm:$0xff]
    %v290 = vld [vmem:[#allocation5 + $0x7c0] sm:$0xff]
    %v291 = vld [vmem:[#allocation5 + $0x7c8] sm:$0xff]
    %v292 = vld [vmem:[#allocation5 + $0x7d0] sm:$0xff]
    %v293 = vld [vmem:[#allocation5 + $0x7d8] sm:$0xff]
    %v294 = vld [vmem:[#allocation5 + $0x7e0] sm:$0xff]
    %v295 = vld [vmem:[#allocation5 + $0x7e8] sm:$0xff]
    %v296 = vld [vmem:[#allocation5 + $0x7f0] sm:$0xff]
    %v297 = vld [vmem:[#allocation5 + $0x7f8] sm:$0xff]
    %298 = vmatprep.subr.mxu0 %v43
    %299 = vmatpush1.msra.mxu0 %v42
    %300 = vmatprep.subr.mxu0 %v47
    %301 = vmatpush1.msra.mxu0 %v46
    %302 = vmatprep.subr.mxu0 %v51
    %303 = vmatpush1.msra.mxu0 %v50
    %304 = vmatprep.subr.mxu0 %v55
    %305 = vmatpush1.msra.mxu0 %v54
    %306 = vmatprep.subr.mxu0 %v59
    %307 = vmatpush1.msra.mxu0 %v58
    %308 = vmatprep.subr.mxu0 %v63
    %309 = vmatpush1.msra.mxu0 %v62
    %310 = vmatprep.subr.mxu0 %v67
    %311 = vmatpush1.msra.mxu0 %v66
    %312 = vmatprep.subr.mxu0 %v71
    %313 = vmatpush1.msra.mxu0 %v70
    %314 = vmatprep.subr.mxu0 %v75
    %315 = vmatpush1.msra.mxu0 %v74
    %316 = vmatprep.subr.mxu0 %v79
    %317 = vmatpush1.msra.mxu0 %v78
    %318 = vmatprep.subr.mxu0 %v83
    %319 = vmatpush1.msra.mxu0 %v82
    %320 = vmatprep.subr.mxu0 %v87
    %321 = vmatpush1.msra.mxu0 %v86
    %322 = vmatprep.subr.mxu0 %v91
    %323 = vmatpush1.msra.mxu0 %v90
    %324 = vmatprep.subr.mxu0 %v95
    %325 = vmatpush1.msra.mxu0 %v94
    %326 = vmatprep.subr.mxu0 %v99
    %327 = vmatpush1.msra.mxu0 %v98
    %328 = vmatprep.subr.mxu0 %v103
    %329 = vmatpush1.msra.mxu0 %v102
    %330 = vmatprep.subr.mxu0 %v107
    %331 = vmatpush1.msra.mxu0 %v106
    %332 = vmatprep.subr.mxu0 %v111
    %333 = vmatpush1.msra.mxu0 %v110
    %334 = vmatprep.subr.mxu0 %v115
    %335 = vmatpush1.msra.mxu0 %v114
    %336 = vmatprep.subr.mxu0 %v119
    %337 = vmatpush1.msra.mxu0 %v118
    %338 = vmatprep.subr.mxu0 %v123
    %339 = vmatpush1.msra.mxu0 %v122
    %340 = vmatprep.subr.mxu0 %v127
    %341 = vmatpush1.msra.mxu0 %v126
    %342 = vmatprep.subr.mxu0 %v131
    %343 = vmatpush1.msra.mxu0 %v130
    %344 = vmatprep.subr.mxu0 %v135
    %345 = vmatpush1.msra.mxu0 %v134
    %346 = vmatprep.subr.mxu0 %v139
    %347 = vmatpush1.msra.mxu0 %v138
    %348 = vmatprep.subr.mxu0 %v143
    %349 = vmatpush1.msra.mxu0 %v142
    %350 = vmatprep.subr.mxu0 %v147
    %351 = vmatpush1.msra.mxu0 %v146
    %352 = vmatprep.subr.mxu0 %v151
    %353 = vmatpush1.msra.mxu0 %v150
    %354 = vmatprep.subr.mxu0 %v155
    %355 = vmatpush1.msra.mxu0 %v154
    %356 = vmatprep.subr.mxu0 %v159
    %357 = vmatpush1.msra.mxu0 %v158
    %358 = vmatprep.subr.mxu0 %v163
    %359 = vmatpush1.msra.mxu0 %v162
    %360 = vmatprep.subr.mxu0 %v167
    %361 = vmatpush1.msra.mxu0 %v166
    %362 = vmatprep.mubr.f32.mxu0 %v39
    %363 = vmatmul.mubr.f32.gmra.mrb[0].mxu0 %v38
    %v364 = vpop.f32.mrb[0].mxu0
    %v365 = vadd.f32 0.0, %v364
    %v366 = vpop.f32.mrb[0].mxu0
    %v367 = vadd.f32 0.0, %v366
    %368 = vdwg.mxu0
    %369 = vmatprep.subr.mxu0 %v171
    %370 = vmatpush1.msra.mxu0 %v170
    %371 = vmatprep.subr.mxu0 %v175
    %372 = vmatpush1.msra.mxu0 %v174
    %373 = vmatprep.subr.mxu0 %v179
    %374 = vmatpush1.msra.mxu0 %v178
    %375 = vmatprep.subr.mxu0 %v183
    %376 = vmatpush1.msra.mxu0 %v182
    %377 = vmatprep.subr.mxu0 %v187
    %378 = vmatpush1.msra.mxu0 %v186
    %379 = vmatprep.subr.mxu0 %v191
    %380 = vmatpush1.msra.mxu0 %v190
    %381 = vmatprep.subr.mxu0 %v195
    %382 = vmatpush1.msra.mxu0 %v194
    %383 = vmatprep.subr.mxu0 %v199
    %384 = vmatpush1.msra.mxu0 %v198
    %385 = vmatprep.subr.mxu0 %v203
    %386 = vmatpush1.msra.mxu0 %v202
    %387 = vmatprep.subr.mxu0 %v207
    %388 = vmatpush1.msra.mxu0 %v206
    %389 = vmatprep.subr.mxu0 %v211
    %390 = vmatpush1.msra.mxu0 %v210
    %391 = vmatprep.subr.mxu0 %v215
    %392 = vmatpush1.msra.mxu0 %v214
    %393 = vmatprep.subr.mxu0 %v219
    %394 = vmatpush1.msra.mxu0 %v218
    %395 = vmatprep.subr.mxu0 %v223
    %396 = vmatpush1.msra.mxu0 %v222
    %397 = vmatprep.subr.mxu0 %v227
    %398 = vmatpush1.msra.mxu0 %v226
    %399 = vmatprep.subr.mxu0 %v231
    %400 = vmatpush1.msra.mxu0 %v230
    %401 = vmatprep.subr.mxu0 %v235
    %402 = vmatpush1.msra.mxu0 %v234
    %403 = vmatprep.subr.mxu0 %v239
    %404 = vmatpush1.msra.mxu0 %v238
    %405 = vmatprep.subr.mxu0 %v243
    %406 = vmatpush1.msra.mxu0 %v242
    %407 = vmatprep.subr.mxu0 %v247
    %408 = vmatpush1.msra.mxu0 %v246
    %409 = vmatprep.subr.mxu0 %v251
    %410 = vmatpush1.msra.mxu0 %v250
    %411 = vmatprep.subr.mxu0 %v255
    %412 = vmatpush1.msra.mxu0 %v254
    %413 = vmatprep.subr.mxu0 %v259
    %414 = vmatpush1.msra.mxu0 %v258
    %415 = vmatprep.subr.mxu0 %v263
    %416 = vmatpush1.msra.mxu0 %v262
    %417 = vmatprep.subr.mxu0 %v267
    %418 = vmatpush1.msra.mxu0 %v266
    %419 = vmatprep.subr.mxu0 %v271
    %420 = vmatpush1.msra.mxu0 %v270
    %421 = vmatprep.subr.mxu0 %v275
    %422 = vmatpush1.msra.mxu0 %v274
    %423 = vmatprep.subr.mxu0 %v279
    %424 = vmatpush1.msra.mxu0 %v278
    %425 = vmatprep.subr.mxu0 %v283
    %426 = vmatpush1.msra.mxu0 %v282
    %427 = vmatprep.subr.mxu0 %v287
    %428 = vmatpush1.msra.mxu0 %v286
    %429 = vmatprep.subr.mxu0 %v291
    %430 = vmatpush1.msra.mxu0 %v290
    %431 = vmatprep.subr.mxu0 %v295
    %432 = vmatpush1.msra.mxu0 %v294
    %433 = vmatprep.mubr.f32.mxu0 %v41
    %434 = vmatmul.mubr.f32.gmra.mrb[0].mxu0 %v40
    %v435 = vpop.f32.mrb[0].mxu0
    %v436 = vadd.f32 %v365, %v435
    %v437 = vpop.f32.mrb[0].mxu0
    %v438 = vadd.f32 %v367, %v437
    %439 = vdwg.mxu0
    %440 = vmatprep.subr.mxu0 %v45
    %441 = vmatpush1.msra.mxu0 %v44
    %442 = vmatprep.subr.mxu0 %v49
    %443 = vmatpush1.msra.mxu0 %v48
    %444 = vmatprep.subr.mxu0 %v53
    %445 = vmatpush1.msra.mxu0 %v52
    %446 = vmatprep.subr.mxu0 %v57
    %447 = vmatpush1.msra.mxu0 %v56
    %448 = vmatprep.subr.mxu0 %v61
    %449 = vmatpush1.msra.mxu0 %v60
    %450 = vmatprep.subr.mxu0 %v65
    %451 = vmatpush1.msra.mxu0 %v64
    %452 = vmatprep.subr.mxu0 %v69
    %453 = vmatpush1.msra.mxu0 %v68
    %454 = vmatprep.subr.mxu0 %v73
    %455 = vmatpush1.msra.mxu0 %v72
    %456 = vmatprep.subr.mxu0 %v77
    %457 = vmatpush1.msra.mxu0 %v76
    %458 = vmatprep.subr.mxu0 %v81
    %459 = vmatpush1.msra.mxu0 %v80
    %460 = vmatprep.subr.mxu0 %v85
    %461 = vmatpush1.msra.mxu0 %v84
    %462 = vmatprep.subr.mxu0 %v89
    %463 = vmatpush1.msra.mxu0 %v88
    %464 = vmatprep.subr.mxu0 %v93
    %465 = vmatpush1.msra.mxu0 %v92
    %466 = vmatprep.subr.mxu0 %v97
    %467 = vmatpush1.msra.mxu0 %v96
    %468 = vmatprep.subr.mxu0 %v101
    %469 = vmatpush1.msra.mxu0 %v100
    %470 = vmatprep.subr.mxu0 %v105
    %471 = vmatpush1.msra.mxu0 %v104
    %472 = vmatprep.subr.mxu0 %v109
    %473 = vmatpush1.msra.mxu0 %v108
    %474 = vmatprep.subr.mxu0 %v113
    %475 = vmatpush1.msra.mxu0 %v112
    %476 = vmatprep.subr.mxu0 %v117
    %477 = vmatpush1.msra.mxu0 %v116
    %478 = vmatprep.subr.mxu0 %v121
    %479 = vmatpush1.msra.mxu0 %v120
    %480 = vmatprep.subr.mxu0 %v125
    %481 = vmatpush1.msra.mxu0 %v124
    %482 = vmatprep.subr.mxu0 %v129
    %483 = vmatpush1.msra.mxu0 %v128
    %484 = vmatprep.subr.mxu0 %v133
    %485 = vmatpush1.msra.mxu0 %v132
    %486 = vmatprep.subr.mxu0 %v137
    %487 = vmatpush1.msra.mxu0 %v136
    %488 = vmatprep.subr.mxu0 %v141
    %489 = vmatpush1.msra.mxu0 %v140
    %490 = vmatprep.subr.mxu0 %v145
    %491 = vmatpush1.msra.mxu0 %v144
    %492 = vmatprep.subr.mxu0 %v149
    %493 = vmatpush1.msra.mxu0 %v148
    %494 = vmatprep.subr.mxu0 %v153
    %495 = vmatpush1.msra.mxu0 %v152
    %496 = vmatprep.subr.mxu0 %v157
    %497 = vmatpush1.msra.mxu0 %v156
    %498 = vmatprep.subr.mxu0 %v161
    %499 = vmatpush1.msra.mxu0 %v160
    %500 = vmatprep.subr.mxu0 %v165
    %501 = vmatpush1.msra.mxu0 %v164
    %502 = vmatprep.subr.mxu0 %v169
    %503 = vmatpush1.msra.mxu0 %v168
    %504 = vmatprep.mubr.f32.mxu0 %v39
    %505 = vmatmul.mubr.f32.gmra.mrb[0].mxu0 %v38
    %v506 = vpop.f32.mrb[0].mxu0
    %v507 = vadd.f32 0.0, %v506
    %v508 = vpop.f32.mrb[0].mxu0
    %v509 = vadd.f32 0.0, %v508
    %510 = vdwg.mxu0
    %511 = vmatprep.subr.mxu0 %v173
    %512 = vmatpush1.msra.mxu0 %v172
    %513 = vmatprep.subr.mxu0 %v177
    %514 = vmatpush1.msra.mxu0 %v176
    %515 = vmatprep.subr.mxu0 %v181
    %516 = vmatpush1.msra.mxu0 %v180
    %517 = vmatprep.subr.mxu0 %v185
    %518 = vmatpush1.msra.mxu0 %v184
    %519 = vmatprep.subr.mxu0 %v189
    %520 = vmatpush1.msra.mxu0 %v188
    %521 = vmatprep.subr.mxu0 %v193
    %522 = vmatpush1.msra.mxu0 %v192
    %523 = vmatprep.subr.mxu0 %v197
    %524 = vmatpush1.msra.mxu0 %v196
    %525 = vmatprep.subr.mxu0 %v201
    %526 = vmatpush1.msra.mxu0 %v200
    %527 = vmatprep.subr.mxu0 %v205
    %528 = vmatpush1.msra.mxu0 %v204
    %529 = vmatprep.subr.mxu0 %v209
    %530 = vmatpush1.msra.mxu0 %v208
    %531 = vmatprep.subr.mxu0 %v213
    %532 = vmatpush1.msra.mxu0 %v212
    %533 = vmatprep.subr.mxu0 %v217
    %534 = vmatpush1.msra.mxu0 %v216
    %535 = vmatprep.subr.mxu0 %v221
    %536 = vmatpush1.msra.mxu0 %v220
    %537 = vmatprep.subr.mxu0 %v225
    %538 = vmatpush1.msra.mxu0 %v224
    %539 = vmatprep.subr.mxu0 %v229
    %540 = vmatpush1.msra.mxu0 %v228
    %541 = vmatprep.subr.mxu0 %v233
    %542 = vmatpush1.msra.mxu0 %v232
    %543 = vmatprep.subr.mxu0 %v237
    %544 = vmatpush1.msra.mxu0 %v236
    %545 = vmatprep.subr.mxu0 %v241
    %546 = vmatpush1.msra.mxu0 %v240
    %547 = vmatprep.subr.mxu0 %v245
    %548 = vmatpush1.msra.mxu0 %v244
    %549 = vmatprep.subr.mxu0 %v249
    %550 = vmatpush1.msra.mxu0 %v248
    %551 = vmatprep.subr.mxu0 %v253
    %552 = vmatpush1.msra.mxu0 %v252
    %553 = vmatprep.subr.mxu0 %v257
    %554 = vmatpush1.msra.mxu0 %v256
    %555 = vmatprep.subr.mxu0 %v261
    %556 = vmatpush1.msra.mxu0 %v260
    %557 = vmatprep.subr.mxu0 %v265
    %558 = vmatpush1.msra.mxu0 %v264
    %559 = vmatprep.subr.mxu0 %v269
    %560 = vmatpush1.msra.mxu0 %v268
    %561 = vmatprep.subr.mxu0 %v273
    %562 = vmatpush1.msra.mxu0 %v272
    %563 = vmatprep.subr.mxu0 %v277
    %564 = vmatpush1.msra.mxu0 %v276
    %565 = vmatprep.subr.mxu0 %v281
    %566 = vmatpush1.msra.mxu0 %v280
    %567 = vmatprep.subr.mxu0 %v285
    %568 = vmatpush1.msra.mxu0 %v284
    %569 = vmatprep.subr.mxu0 %v289
    %570 = vmatpush1.msra.mxu0 %v288
    %571 = vmatprep.subr.mxu0 %v293
    %572 = vmatpush1.msra.mxu0 %v292
    %573 = vmatprep.subr.mxu0 %v297
    %574 = vmatpush1.msra.mxu0 %v296
    %575 = vmatprep.mubr.f32.mxu0 %v41
    %576 = vmatmul.mubr.f32.gmra.mrb[0].mxu0 %v40
    %v577 = vpop.f32.mrb[0].mxu0
    %v578 = vadd.f32 %v507, %v577
    %v579 = vpop.f32.mrb[0].mxu0
    %v580 = vadd.f32 %v509, %v579
    %581 = vdwg.mxu0
    %v582 = vmul.f32 %v38, %v38
    %v583 = vmul.f32 %v39, %v39
    %v584 = vmul.f32 %v40, %v40
    %v585 = vmul.f32 %v41, %v41
    %586 = vmatprep.subr.mxu0 %v43
    %587 = vmatpush1.msra.mxu0 %v42
    %588 = vmatprep.subr.mxu0 %v47
    %589 = vmatpush1.msra.mxu0 %v46
    %590 = vmatprep.subr.mxu0 %v51
    %591 = vmatpush1.msra.mxu0 %v50
    %592 = vmatprep.subr.mxu0 %v55
    %593 = vmatpush1.msra.mxu0 %v54
    %594 = vmatprep.subr.mxu0 %v59
    %595 = vmatpush1.msra.mxu0 %v58
    %596 = vmatprep.subr.mxu0 %v63
    %597 = vmatpush1.msra.mxu0 %v62
    %598 = vmatprep.subr.mxu0 %v67
    %599 = vmatpush1.msra.mxu0 %v66
    %600 = vmatprep.subr.mxu0 %v71
    %601 = vmatpush1.msra.mxu0 %v70
    %602 = vmatprep.subr.mxu0 %v75
    %603 = vmatpush1.msra.mxu0 %v74
    %604 = vmatprep.subr.mxu0 %v79
    %605 = vmatpush1.msra.mxu0 %v78
    %606 = vmatprep.subr.mxu0 %v83
    %607 = vmatpush1.msra.mxu0 %v82
    %608 = vmatprep.subr.mxu0 %v87
    %609 = vmatpush1.msra.mxu0 %v86
    %610 = vmatprep.subr.mxu0 %v91
    %611 = vmatpush1.msra.mxu0 %v90
    %612 = vmatprep.subr.mxu0 %v95
    %613 = vmatpush1.msra.mxu0 %v94
    %614 = vmatprep.subr.mxu0 %v99
    %615 = vmatpush1.msra.mxu0 %v98
    %616 = vmatprep.subr.mxu0 %v103
    %617 = vmatpush1.msra.mxu0 %v102
    %618 = vmatprep.subr.mxu0 %v107
    %619 = vmatpush1.msra.mxu0 %v106
    %620 = vmatprep.subr.mxu0 %v111
    %621 = vmatpush1.msra.mxu0 %v110
    %622 = vmatprep.subr.mxu0 %v115
    %623 = vmatpush1.msra.mxu0 %v114
    %624 = vmatprep.subr.mxu0 %v119
    %625 = vmatpush1.msra.mxu0 %v118
    %626 = vmatprep.subr.mxu0 %v123
    %627 = vmatpush1.msra.mxu0 %v122
    %628 = vmatprep.subr.mxu0 %v127
    %629 = vmatpush1.msra.mxu0 %v126
    %630 = vmatprep.subr.mxu0 %v131
    %631 = vmatpush1.msra.mxu0 %v130
    %632 = vmatprep.subr.mxu0 %v135
    %633 = vmatpush1.msra.mxu0 %v134
    %634 = vmatprep.subr.mxu0 %v139
    %635 = vmatpush1.msra.mxu0 %v138
    %636 = vmatprep.subr.mxu0 %v143
    %637 = vmatpush1.msra.mxu0 %v142
    %638 = vmatprep.subr.mxu0 %v147
    %639 = vmatpush1.msra.mxu0 %v146
    %640 = vmatprep.subr.mxu0 %v151
    %641 = vmatpush1.msra.mxu0 %v150
    %642 = vmatprep.subr.mxu0 %v155
    %643 = vmatpush1.msra.mxu0 %v154
    %644 = vmatprep.subr.mxu0 %v159
    %645 = vmatpush1.msra.mxu0 %v158
    %646 = vmatprep.subr.mxu0 %v163
    %647 = vmatpush1.msra.mxu0 %v162
    %648 = vmatprep.subr.mxu0 %v167
    %649 = vmatpush1.msra.mxu0 %v166
    %650 = vmatprep.mubr.f32.mxu0 %v583
    %651 = vmatmul.mubr.f32.gmra.mrb[0].mxu0 %v582
    %v652 = vpop.f32.mrb[0].mxu0
    %v653 = vadd.f32 0.0, %v652
    %v654 = vpop.f32.mrb[0].mxu0
    %v655 = vadd.f32 0.0, %v654
    %656 = vdwg.mxu0
    %657 = vmatprep.subr.mxu0 %v171
    %658 = vmatpush1.msra.mxu0 %v170
    %659 = vmatprep.subr.mxu0 %v175
    %660 = vmatpush1.msra.mxu0 %v174
    %661 = vmatprep.subr.mxu0 %v179
    %662 = vmatpush1.msra.mxu0 %v178
    %663 = vmatprep.subr.mxu0 %v183
    %664 = vmatpush1.msra.mxu0 %v182
    %665 = vmatprep.subr.mxu0 %v187
    %666 = vmatpush1.msra.mxu0 %v186
    %667 = vmatprep.subr.mxu0 %v191
    %668 = vmatpush1.msra.mxu0 %v190
    %669 = vmatprep.subr.mxu0 %v195
    %670 = vmatpush1.msra.mxu0 %v194
    %671 = vmatprep.subr.mxu0 %v199
    %672 = vmatpush1.msra.mxu0 %v198
    %673 = vmatprep.subr.mxu0 %v203
    %674 = vmatpush1.msra.mxu0 %v202
    %675 = vmatprep.subr.mxu0 %v207
    %676 = vmatpush1.msra.mxu0 %v206
    %677 = vmatprep.subr.mxu0 %v211
    %678 = vmatpush1.msra.mxu0 %v210
    %679 = vmatprep.subr.mxu0 %v215
    %680 = vmatpush1.msra.mxu0 %v214
    %681 = vmatprep.subr.mxu0 %v219
    %682 = vmatpush1.msra.mxu0 %v218
    %683 = vmatprep.subr.mxu0 %v223
    %684 = vmatpush1.msra.mxu0 %v222
    %685 = vmatprep.subr.mxu0 %v227
    %686 = vmatpush1.msra.mxu0 %v226
    %687 = vmatprep.subr.mxu0 %v231
    %688 = vmatpush1.msra.mxu0 %v230
    %689 = vmatprep.subr.mxu0 %v235
    %690 = vmatpush1.msra.mxu0 %v234
    %691 = vmatprep.subr.mxu0 %v239
    %692 = vmatpush1.msra.mxu0 %v238
    %693 = vmatprep.subr.mxu0 %v243
    %694 = vmatpush1.msra.mxu0 %v242
    %695 = vmatprep.subr.mxu0 %v247
    %696 = vmatpush1.msra.mxu0 %v246
    %697 = vmatprep.subr.mxu0 %v251
    %698 = vmatpush1.msra.mxu0 %v250
    %699 = vmatprep.subr.mxu0 %v255
    %700 = vmatpush1.msra.mxu0 %v254
    %701 = vmatprep.subr.mxu0 %v259
    %702 = vmatpush1.msra.mxu0 %v258
    %703 = vmatprep.subr.mxu0 %v263
    %704 = vmatpush1.msra.mxu0 %v262
    %705 = vmatprep.subr.mxu0 %v267
    %706 = vmatpush1.msra.mxu0 %v266
    %707 = vmatprep.subr.mxu0 %v271
    %708 = vmatpush1.msra.mxu0 %v270
    %709 = vmatprep.subr.mxu0 %v275
    %710 = vmatpush1.msra.mxu0 %v274
    %711 = vmatprep.subr.mxu0 %v279
    %712 = vmatpush1.msra.mxu0 %v278
    %713 = vmatprep.subr.mxu0 %v283
    %714 = vmatpush1.msra.mxu0 %v282
    %715 = vmatprep.subr.mxu0 %v287
    %716 = vmatpush1.msra.mxu0 %v286
    %717 = vmatprep.subr.mxu0 %v291
    %718 = vmatpush1.msra.mxu0 %v290
    %719 = vmatprep.subr.mxu0 %v295
    %720 = vmatpush1.msra.mxu0 %v294
    %721 = vmatprep.mubr.f32.mxu0 %v585
    %722 = vmatmul.mubr.f32.gmra.mrb[0].mxu0 %v584
    %v723 = vpop.f32.mrb[0].mxu0
    %v724 = vadd.f32 %v653, %v723
    %v725 = vpop.f32.mrb[0].mxu0
    %v726 = vadd.f32 %v655, %v725
    %727 = vdwg.mxu0
    %728 = vmatprep.subr.mxu0 %v45
    %729 = vmatpush1.msra.mxu0 %v44
    %730 = vmatprep.subr.mxu0 %v49
    %731 = vmatpush1.msra.mxu0 %v48
    %732 = vmatprep.subr.mxu0 %v53
    %733 = vmatpush1.msra.mxu0 %v52
    %734 = vmatprep.subr.mxu0 %v57
    %735 = vmatpush1.msra.mxu0 %v56
    %736 = vmatprep.subr.mxu0 %v61
    %737 = vmatpush1.msra.mxu0 %v60
    %738 = vmatprep.subr.mxu0 %v65
    %739 = vmatpush1.msra.mxu0 %v64
    %740 = vmatprep.subr.mxu0 %v69
    %741 = vmatpush1.msra.mxu0 %v68
    %742 = vmatprep.subr.mxu0 %v73
    %743 = vmatpush1.msra.mxu0 %v72
    %744 = vmatprep.subr.mxu0 %v77
    %745 = vmatpush1.msra.mxu0 %v76
    %746 = vmatprep.subr.mxu0 %v81
    %747 = vmatpush1.msra.mxu0 %v80
    %748 = vmatprep.subr.mxu0 %v85
    %749 = vmatpush1.msra.mxu0 %v84
    %750 = vmatprep.subr.mxu0 %v89
    %751 = vmatpush1.msra.mxu0 %v88
    %752 = vmatprep.subr.mxu0 %v93
    %753 = vmatpush1.msra.mxu0 %v92
    %754 = vmatprep.subr.mxu0 %v97
    %755 = vmatpush1.msra.mxu0 %v96
    %756 = vmatprep.subr.mxu0 %v101
    %757 = vmatpush1.msra.mxu0 %v100
    %758 = vmatprep.subr.mxu0 %v105
    %759 = vmatpush1.msra.mxu0 %v104
    %760 = vmatprep.subr.mxu0 %v109
    %761 = vmatpush1.msra.mxu0 %v108
    %762 = vmatprep.subr.mxu0 %v113
    %763 = vmatpush1.msra.mxu0 %v112
    %764 = vmatprep.subr.mxu0 %v117
    %765 = vmatpush1.msra.mxu0 %v116
    %766 = vmatprep.subr.mxu0 %v121
    %767 = vmatpush1.msra.mxu0 %v120
    %768 = vmatprep.subr.mxu0 %v125
    %769 = vmatpush1.msra.mxu0 %v124
    %770 = vmatprep.subr.mxu0 %v129
    %771 = vmatpush1.msra.mxu0 %v128
    %772 = vmatprep.subr.mxu0 %v133
    %773 = vmatpush1.msra.mxu0 %v132
    %774 = vmatprep.subr.mxu0 %v137
    %775 = vmatpush1.msra.mxu0 %v136
    %776 = vmatprep.subr.mxu0 %v141
    %777 = vmatpush1.msra.mxu0 %v140
    %778 = vmatprep.subr.mxu0 %v145
    %779 = vmatpush1.msra.mxu0 %v144
    %780 = vmatprep.subr.mxu0 %v149
    %781 = vmatpush1.msra.mxu0 %v148
    %782 = vmatprep.subr.mxu0 %v153
    %783 = vmatpush1.msra.mxu0 %v152
    %784 = vmatprep.subr.mxu0 %v157
    %785 = vmatpush1.msra.mxu0 %v156
    %786 = vmatprep.subr.mxu0 %v161
    %787 = vmatpush1.msra.mxu0 %v160
    %788 = vmatprep.subr.mxu0 %v165
    %789 = vmatpush1.msra.mxu0 %v164
    %790 = vmatprep.subr.mxu0 %v169
    %791 = vmatpush1.msra.mxu0 %v168
    %792 = vmatprep.mubr.f32.mxu0 %v583
    %793 = vmatmul.mubr.f32.gmra.mrb[0].mxu0 %v582
    %v794 = vpop.f32.mrb[0].mxu0
    %v795 = vadd.f32 0.0, %v794
    %v796 = vpop.f32.mrb[0].mxu0
    %v797 = vadd.f32 0.0, %v796
    %798 = vdwg.mxu0
    %799 = vmatprep.subr.mxu0 %v173
    %800 = vmatpush1.msra.mxu0 %v172
    %801 = vmatprep.subr.mxu0 %v177
    %802 = vmatpush1.msra.mxu0 %v176
    %803 = vmatprep.subr.mxu0 %v181
    %804 = vmatpush1.msra.mxu0 %v180
    %805 = vmatprep.subr.mxu0 %v185
    %806 = vmatpush1.msra.mxu0 %v184
    %807 = vmatprep.subr.mxu0 %v189
    %808 = vmatpush1.msra.mxu0 %v188
    %809 = vmatprep.subr.mxu0 %v193
    %810 = vmatpush1.msra.mxu0 %v192
    %811 = vmatprep.subr.mxu0 %v197
    %812 = vmatpush1.msra.mxu0 %v196
    %813 = vmatprep.subr.mxu0 %v201
    %814 = vmatpush1.msra.mxu0 %v200
    %815 = vmatprep.subr.mxu0 %v205
    %816 = vmatpush1.msra.mxu0 %v204
    %817 = vmatprep.subr.mxu0 %v209
    %818 = vmatpush1.msra.mxu0 %v208
    %819 = vmatprep.subr.mxu0 %v213
    %820 = vmatpush1.msra.mxu0 %v212
    %821 = vmatprep.subr.mxu0 %v217
    %822 = vmatpush1.msra.mxu0 %v216
    %823 = vmatprep.subr.mxu0 %v221
    %824 = vmatpush1.msra.mxu0 %v220
    %825 = vmatprep.subr.mxu0 %v225
    %826 = vmatpush1.msra.mxu0 %v224
    %827 = vmatprep.subr.mxu0 %v229
    %828 = vmatpush1.msra.mxu0 %v228
    %829 = vmatprep.subr.mxu0 %v233
    %830 = vmatpush1.msra.mxu0 %v232
    %831 = vmatprep.subr.mxu0 %v237
    %832 = vmatpush1.msra.mxu0 %v236
    %833 = vmatprep.subr.mxu0 %v241
    %834 = vmatpush1.msra.mxu0 %v240
    %835 = vmatprep.subr.mxu0 %v245
    %836 = vmatpush1.msra.mxu0 %v244
    %837 = vmatprep.subr.mxu0 %v249
    %838 = vmatpush1.msra.mxu0 %v248
    %839 = vmatprep.subr.mxu0 %v253
    %840 = vmatpush1.msra.mxu0 %v252
    %841 = vmatprep.subr.mxu0 %v257
    %842 = vmatpush1.msra.mxu0 %v256
    %843 = vmatprep.subr.mxu0 %v261
    %844 = vmatpush1.msra.mxu0 %v260
    %845 = vmatprep.subr.mxu0 %v265
    %846 = vmatpush1.msra.mxu0 %v264
    %847 = vmatprep.subr.mxu0 %v269
    %848 = vmatpush1.msra.mxu0 %v268
    %849 = vmatprep.subr.mxu0 %v273
    %850 = vmatpush1.msra.mxu0 %v272
    %851 = vmatprep.subr.mxu0 %v277
    %852 = vmatpush1.msra.mxu0 %v276
    %853 = vmatprep.subr.mxu0 %v281
    %854 = vmatpush1.msra.mxu0 %v280
    %855 = vmatprep.subr.mxu0 %v285
    %856 = vmatpush1.msra.mxu0 %v284
    %857 = vmatprep.subr.mxu0 %v289
    %858 = vmatpush1.msra.mxu0 %v288
    %859 = vmatprep.subr.mxu0 %v293
    %860 = vmatpush1.msra.mxu0 %v292
    %861 = vmatprep.subr.mxu0 %v297
    %862 = vmatpush1.msra.mxu0 %v296
    %863 = vmatprep.mubr.f32.mxu0 %v585
    %864 = vmatmul.mubr.f32.gmra.mrb[0].mxu0 %v584
    %v865 = vpop.f32.mrb[0].mxu0
    %v866 = vadd.f32 %v795, %v865
    %v867 = vpop.f32.mrb[0].mxu0
    %v868 = vadd.f32 %v797, %v867
    %869 = vdwg.mxu0
    %v870 = vmul.f32 %v436, 0.0625
    %v871 = vmul.f32 %v438, 0.0625
    %v872 = vmul.f32 %v578, 0.0625
    %v873 = vmul.f32 %v580, 0.0625
    %v874 = vmul.f32 %v870, %v436
    %v875 = vmul.f32 %v871, %v438
    %v876 = vmul.f32 %v872, %v578
    %v877 = vmul.f32 %v873, %v580
    %v878 = vsub.f32 %v724, %v874
    %v879 = vsub.f32 %v726, %v875
    %v880 = vsub.f32 %v866, %v876
    %v881 = vsub.f32 %v868, %v877
    %v882 = vmul.f32 %v878, 0.06666667
    %v883 = vmul.f32 %v879, 0.06666667
    %v884 = vmul.f32 %v880, 0.06666667
    %v885 = vmul.f32 %v881, 0.06666667
    %v886 = vadd.f32 %v882, 1e-06
    %v887 = vadd.f32 %v883, 1e-06
    %v888 = vadd.f32 %v884, 1e-06
    %v889 = vadd.f32 %v885, 1e-06
    %v890 = vrsqrt.pop %v886
    %v891 = vrsqrt.pop %v887
    %v892 = vrsqrt.pop %v888
    %v893 = vrsqrt.pop %v889
    %v894 = vsub.f32 %v38, %v870
    %v895 = vsub.f32 %v39, %v871
    %v896 = vsub.f32 %v40, %v872
    %v897 = vsub.f32 %v41, %v873
    %v898 = vmul.f32 %v894, %v890
    %v899 = vmul.f32 %v895, %v891
    %v900 = vmul.f32 %v896, %v892
    %v901 = vmul.f32 %v897, %v893
    %902 = vst [vmem:[#allocation7] sm:$0xff] %v898
    %903 = vst [vmem:[#allocation7 + $0x8] sm:$0xff] %v899
    %904 = vst [vmem:[#allocation7 + $0x10] sm:$0xff] %v900
    %905 = vst [vmem:[#allocation7 + $0x18] sm:$0xff] %v901
    // Predicated region
    $region18: #{tpu_custom_call.1} parent=1 // pred_check
      _
    $region19: #{tpu_custom_call.1} parent=1 // pred_check_branch
      %907 = sbr.rel (0) target = $region21
    $region20: #{tpu_custom_call.1} parent=1 // pred_region
      %s909 = ssub.s32 512, 512
      %910 = vsyncadd [#allocation4], %s909
      %s912 = sshll.u32 [#allocation7], 4
      %s913 = int_to_ptr.vmem [resolvable:$true] %s912
      %915 = dma.vmem_to_hbm [thread:$0]  %s913, 512, %s2, [#allocation4]
    $region21: #{tpu_custom_call.1} parent=1 // pred_fallthru
      _
    // Predicated region
    $region22: #{tpu_custom_call.1} parent=1 // pred_check
      _
    $region23: #{tpu_custom_call.1} parent=1 // pred_check_branch
      %917 = sbr.rel (0) target = $region25
    $region24: #{tpu_custom_call.1} parent=1 // pred_region
      %918 = dma.done [#allocation4], 512
    $region25: #{tpu_custom_call.1} parent=1 // pred_fallthru
      _
    %919 = vsyncpa [#allocation3], 1
    %920 = vsyncpa [#allocation6], 1
    %921 = vsyncpa [#allocation4], 1

</llo_original>
